<compile_context>
chip_gen: v5e
topology: v5e:2x2
jax: 0.10.0
libtpu: 0.0.40
codegen_flags: <defaults>
</compile_context>

<pallas_src>
import jax
import jax.numpy as jnp
from jax.experimental import pallas as pl
from jax.experimental.pallas import tpu as pltpu


def _cdiv(a, b):
    return -(-a // b)


def _round_up(x, m):
    return _cdiv(x, m) * m


_HW_TILE_MAX = 128 * 1024  # lanes per spatial tile (~64K-128K hits HBM roofline)


def _make_iou_kernel(hw, hw_tile, ragged):
    def kernel(inp_ref, tgt_ref, iou_ref, inter_acc, both_acc):
        k = pl.program_id(1)

        @pl.when(k == 0)
        def _init():
            inter_acc[...] = jnp.zeros_like(inter_acc)
            both_acc[...] = jnp.zeros_like(both_acc)

        x = inp_ref[...]
        t = tgt_ref[...]
        # sigmoid(x) > 0.5  <=>  x > 0  (exact, also exact in bf16).
        pred = x > 0
        tgt = t > 0.5
        if ragged:
            # Mask lanes past the true H*W extent (overhanging last block).
            col = jax.lax.broadcasted_iota(jnp.int32, (1, hw_tile), 1) + k * hw_tile
            valid = col < hw
            pred = jnp.logical_and(pred, valid)
            tgt = jnp.logical_and(tgt, valid)
        predf = pred.astype(jnp.float32)
        tgtf = tgt.astype(jnp.float32)

        # f32 accumulation keeps the pixel counts exact (incl. bf16 inputs).
        inter_acc[...] += jnp.sum(predf * tgtf, axis=-1, keepdims=True)
        both_acc[...] += jnp.sum(predf + tgtf, axis=-1, keepdims=True)

        @pl.when(k == pl.num_programs(1) - 1)
        def _finalize():
            smooth = jnp.float32(1e-08)
            inter = inter_acc[...]
            union = both_acc[...] - inter          # |pred| + |tgt| - |pred & tgt|
            iou_ref[...] = (inter + smooth) / (union + smooth)

    return kernel


def intersection_over_union(inputs, targets):
    """Batch-mean IoU of thresholded sigmoid(inputs) vs thresholded targets.

    inputs (logits) and targets have shape (B, H, W); matches the PyTorch
    forward: mean_b (|pred_b & tgt_b| + 1e-8) / (|pred_b | tgt_b| + 1e-8).
    """
    B, H, W = inputs.shape
    HW = H * W

    # Layout-only reshape; no cast / pad -> no extra HBM pass before the kernel.
    x = inputs.reshape(B, HW)
    t = targets.reshape(B, HW)

    # ---- VMEM budget derived from the actual chip (v5e/v6e 128 MiB, v7x 64 MiB).
    try:
        vmem_cap = int(pltpu.get_tpu_info().vmem_capacity_bytes)
    except Exception:
        vmem_cap = 64 << 20  # conservative (v7x-sized) fallback
    buf_budget = min(vmem_cap // 2, 48 << 20)           # total for pipelined inputs
    vmem_limit = int(max(32 << 20, min(vmem_cap - (8 << 20), 96 << 20)))

    bytes_per_pix = x.dtype.itemsize + t.dtype.itemsize
    sub = 16 if min(x.dtype.itemsize, t.dtype.itemsize) < 4 else 8  # sublane pack

    # ---- spatial tile: lane-dense (multiple of 128) unless HW < 128 ----------
    if HW < 128:
        hw_tile = HW                                    # == full array dim (allowed)
    else:
        hw_tile = min(_HW_TILE_MAX, (HW // 128) * 128)
        while 2 * sub * hw_tile * bytes_per_pix > buf_budget and hw_tile > 128:
            hw_tile = max(128, (hw_tile // 2) // 128 * 128)
    nk = _cdiv(HW, hw_tile)
    ragged = (HW % hw_tile) != 0

    # ---- batch tile -----------------------------------------------------------
    if B <= sub:
        tb = B                                          # == full array dim (allowed)
    else:
        tb_cap = buf_budget // (2 * hw_tile * bytes_per_pix)   # 2 = double buffer
        tb_cap = max(sub, (tb_cap // sub) * sub)
        tb = min(_round_up(B, sub), tb_cap)
        if _cdiv(B, tb) == 1:
            # Keep >= 2 batch steps so the "parallel" axis feeds both TCs (v7x).
            tb = max(sub, min(tb, _round_up(_cdiv(B, 2), sub)))
    nb = _cdiv(B, tb)
    bp = nb * tb

    kernel = _make_iou_kernel(HW, hw_tile, ragged)

    iou = pl.pallas_call(
        kernel,
        out_shape=jax.ShapeDtypeStruct((bp, 1), jnp.float32),
        grid_spec=pltpu.PrefetchScalarGridSpec(
            num_scalar_prefetch=0,
            grid=(nb, nk),                              # reduction (spatial) axis last
            in_specs=[
                pl.BlockSpec((tb, hw_tile), lambda i, k: (i, k)),
                pl.BlockSpec((tb, hw_tile), lambda i, k: (i, k)),
            ],
            out_specs=pl.BlockSpec((tb, 1), lambda i, k: (i, 0)),
            scratch_shapes=[
                pltpu.VMEM((tb, 1), jnp.float32),       # intersection accumulator
                pltpu.VMEM((tb, 1), jnp.float32),       # sum(pred)+sum(tgt) accumulator
            ],
        ),
        compiler_params=pltpu.CompilerParams(
            dimension_semantics=("parallel", "arbitrary"),
            vmem_limit_bytes=vmem_limit,
        ),
    )(x, t)

    # Rows >= B (overhang of the last batch block) hold garbage; drop them.
    return jnp.mean(iou[:B, 0])


def _reference(inputs, targets):
    """Pure-JAX reference matching the PyTorch forward."""
    x = jax.nn.sigmoid(inputs)
    pred = (x > 0.5).astype(jnp.int32)
    tgt = (targets > 0.5).astype(jnp.int32)
    inter = jnp.sum(pred & tgt, axis=(1, 2)).astype(jnp.float32)
    union = jnp.sum(pred | tgt, axis=(1, 2)).astype(jnp.float32)
    smooth = 1e-08
    iou = (inter + smooth) / (union + smooth)
    return jnp.mean(iou)


if __name__ == "__main__":
    key = jax.random.PRNGKey(0)
    k1, k2 = jax.random.split(key)

    B, H, W = 2, 16, 16
    inputs = jax.random.normal(k1, (B, H, W), dtype=jnp.float32)      # logits
    targets = jax.random.uniform(k2, (B, H, W), dtype=jnp.float32)    # labels in [0, 1]

    out = jax.block_until_ready(intersection_over_union(inputs, targets))
    ref = jax.block_until_ready(_reference(inputs, targets))
    assert jnp.allclose(out, ref, rtol=1e-5, atol=1e-6), (out, ref)

    print("KERNEL_OK")
</pallas_src>

<mosaic_0001>
module attributes {stable_mosaic.version = 11 : i64} {
  func.func @kernel(%arg0: i32, %arg1: i32, %arg2: memref<2x256xf32, #tpu.memory_space<vmem>>, %arg3: memref<2x256xf32, #tpu.memory_space<vmem>>, %arg4: memref<2x1xf32, #tpu.memory_space<vmem>>, %arg5: memref<2x1xf32, #tpu.memory_space<vmem>>, %arg6: memref<2x1xf32, #tpu.memory_space<vmem>>) attributes {dimension_semantics = [#tpu.dimension_semantics<parallel>, #tpu.dimension_semantics<arbitrary>], iteration_bounds = array<i64: 1, 1>, scalar_prefetch = 0 : i64, scratch_operands = 2 : i64, tpu.core_type = #tpu.core_type<tc>, window_params = [{transform_indices = @transform_0, window_bounds = array<i64: 2, 256>}, {transform_indices = @transform_1, window_bounds = array<i64: 2, 256>}, {transform_indices = @transform_2, window_bounds = array<i64: 2, 1>}]} {
    %c0_i32 = arith.constant 0 : i32
    %0 = arith.cmpi eq, %arg1, %c0_i32 : i32
    %1 = arith.extui %0 : i1 to i32
    %c0_i32_0 = arith.constant 0 : i32
    %2 = arith.cmpi ne, %1, %c0_i32_0 : i32
    scf.if %2 {
      %cst_17 = arith.constant 0.000000e+00 : f32
      %28 = vector.broadcast %cst_17 : f32 to vector<2x1xf32>
      %c0_18 = arith.constant 0 : index
      %c0_19 = arith.constant 0 : index
      %29 = vector.load %arg5[%c0_18, %c0_19] : memref<2x1xf32, #tpu.memory_space<vmem>>, vector<2x1xf32>
      tpu.vector_store %arg5[%c0_18, %c0_19], %28 {strides = array<i32>} : memref<2x1xf32, #tpu.memory_space<vmem>>, vector<2x1xf32>,
      %cst_20 = arith.constant 0.000000e+00 : f32
      %30 = vector.broadcast %cst_20 : f32 to vector<2x1xf32>
      %c0_21 = arith.constant 0 : index
      %c0_22 = arith.constant 0 : index
      %31 = vector.load %arg6[%c0_21, %c0_22] : memref<2x1xf32, #tpu.memory_space<vmem>>, vector<2x1xf32>
      tpu.vector_store %arg6[%c0_21, %c0_22], %30 {strides = array<i32>} : memref<2x1xf32, #tpu.memory_space<vmem>>, vector<2x1xf32>,
    } else {
    }
    %c0 = arith.constant 0 : index
    %c0_1 = arith.constant 0 : index
    %3 = vector.load %arg2[%c0, %c0_1] : memref<2x256xf32, #tpu.memory_space<vmem>>, vector<2x256xf32>
    %c0_2 = arith.constant 0 : index
    %c0_3 = arith.constant 0 : index
    %4 = vector.load %arg3[%c0_2, %c0_3] : memref<2x256xf32, #tpu.memory_space<vmem>>, vector<2x256xf32>
    %cst = arith.constant 0.000000e+00 : f32
    %5 = vector.broadcast %cst : f32 to vector<2x256xf32>
    %6 = arith.cmpf ogt, %3, %5 : vector<2x256xf32>
    %cst_4 = arith.constant 5.000000e-01 : f32
    %7 = vector.broadcast %cst_4 : f32 to vector<2x256xf32>
    %8 = arith.cmpf ogt, %4, %7 : vector<2x256xf32>
    %9 = arith.extui %6 : vector<2x256xi1> to vector<2x256xi32>
    %10 = arith.sitofp %9 : vector<2x256xi32> to vector<2x256xf32>
    %11 = arith.extui %8 : vector<2x256xi1> to vector<2x256xi32>
    %12 = arith.sitofp %11 : vector<2x256xi32> to vector<2x256xf32>
    %c0_5 = arith.constant 0 : index
    %c0_6 = arith.constant 0 : index
    %13 = vector.load %arg5[%c0_5, %c0_6] : memref<2x1xf32, #tpu.memory_space<vmem>>, vector<2x1xf32>
    %14 = arith.mulf %10, %12 : vector<2x256xf32>
    %cst_7 = arith.constant dense<0.000000e+00> : vector<2xf32>
    %15 = vector.multi_reduction <add>, %14, %cst_7 [1] : vector<2x256xf32> to vector<2xf32>
    %16 = vector.shape_cast %15 : vector<2xf32> to vector<2x1xf32>
    %17 = arith.addf %13, %16 : vector<2x1xf32>
    %c0_8 = arith.constant 0 : index
    %c0_9 = arith.constant 0 : index
    %18 = vector.load %arg5[%c0_8, %c0_9] : memref<2x1xf32, #tpu.memory_space<vmem>>, vector<2x1xf32>
    tpu.vector_store %arg5[%c0_8, %c0_9], %17 {strides = array<i32>} : memref<2x1xf32, #tpu.memory_space<vmem>>, vector<2x1xf32>,
    %c0_10 = arith.constant 0 : index
    %c0_11 = arith.constant 0 : index
    %19 = vector.load %arg6[%c0_10, %c0_11] : memref<2x1xf32, #tpu.memory_space<vmem>>, vector<2x1xf32>
    %20 = arith.addf %10, %12 : vector<2x256xf32>
    %cst_12 = arith.constant dense<0.000000e+00> : vector<2xf32>
    %21 = vector.multi_reduction <add>, %20, %cst_12 [1] : vector<2x256xf32> to vector<2xf32>
    %22 = vector.shape_cast %21 : vector<2xf32> to vector<2x1xf32>
    %23 = arith.addf %19, %22 : vector<2x1xf32>
    %c0_13 = arith.constant 0 : index
    %c0_14 = arith.constant 0 : index
    %24 = vector.load %arg6[%c0_13, %c0_14] : memref<2x1xf32, #tpu.memory_space<vmem>>, vector<2x1xf32>
    tpu.vector_store %arg6[%c0_13, %c0_14], %23 {strides = array<i32>} : memref<2x1xf32, #tpu.memory_space<vmem>>, vector<2x1xf32>,
    %c0_i32_15 = arith.constant 0 : i32
    %25 = arith.cmpi eq, %arg1, %c0_i32_15 : i32
    %26 = arith.extui %25 : i1 to i32
    %c0_i32_16 = arith.constant 0 : i32
    %27 = arith.cmpi ne, %26, %c0_i32_16 : i32
    scf.if %27 {
      %c0_17 = arith.constant 0 : index
      %c0_18 = arith.constant 0 : index
      %28 = vector.load %arg5[%c0_17, %c0_18] : memref<2x1xf32, #tpu.memory_space<vmem>>, vector<2x1xf32>
      %c0_19 = arith.constant 0 : index
      %c0_20 = arith.constant 0 : index
      %29 = vector.load %arg6[%c0_19, %c0_20] : memref<2x1xf32, #tpu.memory_space<vmem>>, vector<2x1xf32>
      %30 = arith.subf %29, %28 : vector<2x1xf32>
      %cst_21 = arith.constant 9.99999993E-9 : f32
      %31 = vector.broadcast %cst_21 : f32 to vector<2x1xf32>
      %32 = arith.addf %28, %31 : vector<2x1xf32>
      %cst_22 = arith.constant 9.99999993E-9 : f32
      %33 = vector.broadcast %cst_22 : f32 to vector<2x1xf32>
      %34 = arith.addf %30, %33 : vector<2x1xf32>
      %35 = arith.divf %32, %34 : vector<2x1xf32>
      %c0_23 = arith.constant 0 : index
      %c0_24 = arith.constant 0 : index
      %36 = vector.load %arg4[%c0_23, %c0_24] : memref<2x1xf32, #tpu.memory_space<vmem>>, vector<2x1xf32>
      tpu.vector_store %arg4[%c0_23, %c0_24], %35 {strides = array<i32>} : memref<2x1xf32, #tpu.memory_space<vmem>>, vector<2x1xf32>,
    } else {
    }
    return
  }
  func.func @transform_0(%arg0: i32, %arg1: i32) -> (i32, i32) {
    %c0_i32 = arith.constant 0 : i32
    return %arg0, %arg1 : i32, i32
  }
  func.func @transform_1(%arg0: i32, %arg1: i32) -> (i32, i32) {
    %c0_i32 = arith.constant 0 : i32
    return %arg0, %arg1 : i32, i32
  }
  func.func @transform_2(%arg0: i32, %arg1: i32) -> (i32, i32) {
    %c0_i32 = arith.constant 0 : i32
    %c0_i32_0 = arith.constant 0 : i32
    return %arg0, %c0_i32 : i32, i32
  }
}

</mosaic_0001>

<llo_original>
// kernel: tpu_custom_call.1
$region0: #{tpu_custom_call.1}
  #allocation0 [shape = 'u32[]', space=smem, size = 0x4, offset = 0x4, fixed_abs, tag = 'smem constant byte address 0x4 - core index']
  #allocation1 [shape = 'u32[72,128]{1,0:T(1,128)}', space=vmem, size = 0x9000, scoped, tag = 'internal scratch']
  #allocation2 [shape = 'f32[2,1]{1,0:T(2,128)}', space=vmem, size = 0x400, scoped, tag = 'scratch operand']
  #allocation3 [shape = 'f32[2,1]{1,0:T(2,128)}', space=vmem, size = 0x400, scoped, tag = 'scratch operand']
  %s0 = inlined_call_operand.hbm [shape: f32[2,256], index: 0, kind: input, shape index: {}]
  %s1 = inlined_call_operand.hbm [shape: f32[2,256], index: 1, kind: input, shape index: {}]
  %s2 = inlined_call_operand.vmem [shape: f32[2,1], index: 2, kind: output, shape index: {}]
  %s3 = sld [smem:[#allocation0]]
  $region34: #{tpu_custom_call.1} parent=0
    _
  %s5 = ssub.s32 1, %s3
  %s6 = scalar_select 0, %s5, %s3
  $region1: #{tpu_custom_call.1} parent=0
    #allocation4 [shape = 'u8[2048]{0}', space=vmem, size = 0x800, scoped, tag = 'input window, operand 0, single buffered']
    #allocation5 [shape = 's32[1]{0}', space=sflag, size = 0x4, scoped, tag = 'scoped memory for tpu_custom_call.1']
    #allocation6 [shape = 'u8[2048]{0}', space=vmem, size = 0x800, scoped, tag = 'input window, operand 1, single buffered']
    #allocation7 [shape = 's32[1]{0}', space=sflag, size = 0x4, scoped, tag = 'scoped memory for tpu_custom_call.1']
    %7 = vsyncpa [#allocation5], 0
    %8 = vsyncpa [#allocation7], 0
    // Predicated region
    $region2: #{tpu_custom_call.1} parent=1 // pred_check
      _
    $region3: #{tpu_custom_call.1} parent=1 // pred_check_branch
      %10 = sbr.rel (0) target = $region5
    $region4: #{tpu_custom_call.1} parent=1 // pred_region
      %12 = vsyncadd [#allocation5], 0
      %s14 = sshll.u32 %s0, 4
      %s15 = int_to_ptr.hbm [resolvable:$true] %s14
      %s16 = sshll.u32 [#allocation4], 4
      %s17 = int_to_ptr.vmem [resolvable:$true] %s16
      %19 = dma.hbm_to_vmem [thread:$0]  %s15, 64, %s17, [#allocation5]
    $region5: #{tpu_custom_call.1} parent=1 // pred_fallthru
      _
    // Predicated region
    $region6: #{tpu_custom_call.1} parent=1 // pred_check
      _
    $region7: #{tpu_custom_call.1} parent=1 // pred_check_branch
      %21 = sbr.rel (0) target = $region9
    $region8: #{tpu_custom_call.1} parent=1 // pred_region
      %23 = vsyncadd [#allocation7], 0
      %s25 = sshll.u32 %s1, 4
      %s26 = int_to_ptr.hbm [resolvable:$true] %s25
      %s27 = sshll.u32 [#allocation6], 4
      %s28 = int_to_ptr.vmem [resolvable:$true] %s27
      %30 = dma.hbm_to_vmem [thread:$0]  %s26, 64, %s28, [#allocation7]
    $region9: #{tpu_custom_call.1} parent=1 // pred_fallthru
      _
    // Predicated region
    $region10: #{tpu_custom_call.1} parent=1 // pred_check
      _
    $region11: #{tpu_custom_call.1} parent=1 // pred_check_branch
      %32 = sbr.rel (0) target = $region13
    $region12: #{tpu_custom_call.1} parent=1 // pred_region
      %34 = dma.done [#allocation5], 64
    $region13: #{tpu_custom_call.1} parent=1 // pred_fallthru
      _
    // Predicated region
    $region14: #{tpu_custom_call.1} parent=1 // pred_check
      _
    $region15: #{tpu_custom_call.1} parent=1 // pred_check_branch
      %36 = sbr.rel (0) target = $region17
    $region16: #{tpu_custom_call.1} parent=1 // pred_region
      %38 = dma.done [#allocation7], 64
    $region17: #{tpu_custom_call.1} parent=1 // pred_fallthru
      _
    %p39 = scmp.eq.s32.totalorder 0, 0
    // Predicated region
    $region18: #{tpu_custom_call.1} parent=1 // pred_check
      %p40 = pneg %p39
    $region19: #{tpu_custom_call.1} parent=1 // pred_check_branch
      %42 = sbr.rel (%p40) target = $region21
    $region20: #{tpu_custom_call.1} parent=1 // pred_region
      %vm43 = vcmask 1024
      %44 = vst.msk [vmem:[#allocation2] sm:$0x3] %vm43, 0.0
      %45 = vst.msk [vmem:[#allocation3] sm:$0x3] %vm43, 0.0
    $region21: #{tpu_custom_call.1} parent=1 // pred_fallthru
      _
    %v46 = vld [vmem:[#allocation4] sm:$0xf]
    %v47 = vld [vmem:[#allocation6] sm:$0xf]
    %vm48 = vcmp.gt.f32.partialorder %v46, 0.0
    %vm49 = vcmp.gt.f32.partialorder %v47, 0.5
    %v50 = vsel %vm48, 1, 0
    %v51 = vcvt.s32.f32 %v50
    %v52 = vsel %vm49, 1, 0
    %v53 = vcvt.s32.f32 %v52
    %v54 = vld [vmem:[#allocation2] sm:$0x3]
    %v55 = vmul.f32 %v51, %v53
    %57 = vst [vmem:[#allocation1] ss:$4 sm:$0xff] %v55
    %v58 = vld.sshfl [vmem:[#allocation1] sm:$0xff pattern:$0x73625140]
    %v59 = vld.sshfl [vmem:[#allocation1 + $0x8] sm:$0xff pattern:$0x73625140]
    %vm62 = vcmask 1041408
    %v63 = vsel %vm62, %v58, 0.0
    %v64 = vsel %vm62, %v59, 0.0
    %v65 = vadd.f32 %v63, %v64
    %66 = vadd.xlane.f32.xlu0 %v65
    %v67 = vpop.xlane.xlu0 %66
    %v68 = vadd.f32 %v54, %v67
    %vm69 = vcmask 1024
    %70 = vst.msk [vmem:[#allocation2] sm:$0x3] %vm69, %v68
    %v71 = vld [vmem:[#allocation3] sm:$0x3]
    %v72 = vadd.f32 %v51, %v53
    %74 = vst [vmem:[#allocation1] ss:$4 sm:$0xff] %v72
    %v75 = vld.sshfl [vmem:[#allocation1] sm:$0xff pattern:$0x73625140]
    %v76 = vld.sshfl [vmem:[#allocation1 + $0x8] sm:$0xff pattern:$0x73625140]
    %v79 = vsel %vm62, %v75, 0.0
    %v80 = vsel %vm62, %v76, 0.0
    %v81 = vadd.f32 %v79, %v80
    %82 = vadd.xlane.f32.xlu0 %v81
    %v83 = vpop.xlane.xlu0 %82
    %v84 = vadd.f32 %v71, %v83
    %85 = vst.msk [vmem:[#allocation3] sm:$0x3] %vm69, %v84
    // Predicated region
    $region22: #{tpu_custom_call.1} parent=1 // pred_check
      %p86 = pneg %p39
    $region23: #{tpu_custom_call.1} parent=1 // pred_check_branch
      %88 = sbr.rel (%p86) target = $region25
    $region24: #{tpu_custom_call.1} parent=1 // pred_region
      %v89 = vld [vmem:[#allocation2] sm:$0x3]
      %v90 = vld [vmem:[#allocation3] sm:$0x3]
      %v91 = vsub.f32 %v90, %v89
      %v92 = vadd.f32 %v89, 1e-08
      %v93 = vadd.f32 %v91, 1e-08
      %v94 = vrcp.pop %v93
      %v95 = vmul.f32 %v93, %v94
      %v96 = vsub.f32 1.0, %v95
      %v97 = vmul.f32 %v94, %v96
      %v98 = vadd.f32 %v94, %v97
      %vm99 = vweird.f32 %v93
      %vm100 = vweird.f32 %v94
      %vm101 = vmor %vm99, %vm100
      %v102 = vsel %vm101, %v94, %v98
      %v103 = vand.u32 2147483647, %v93
      %vm104 = vcmp.eq.f32.partialorder %v103, 8.507059e+37
      %v105 = vand.u32 %v93, 2147483648
      %v106 = vor.u32 1.1754944e-38, %v105
      %v107 = vsel %vm104, %v106, %v102
      %v108 = vmul.f32 %v92, %v107
      %109 = vst.msk [vmem:[%s2] sm:$0x3] %vm69, %v108
    $region25: #{tpu_custom_call.1} parent=1 // pred_fallthru
      _
    // Predicated region
    $region26: #{tpu_custom_call.1} parent=1 // pred_check
      _
    $region27: #{tpu_custom_call.1} parent=1 // pred_check_branch
      %111 = sbr.rel (0) target = $region29
    $region28: #{tpu_custom_call.1} parent=1 // pred_region
      _
    $region29: #{tpu_custom_call.1} parent=1 // pred_fallthru
      _
    // Predicated region
    $region30: #{tpu_custom_call.1} parent=1 // pred_check
      _
    $region31: #{tpu_custom_call.1} parent=1 // pred_check_branch
      %113 = sbr.rel (0) target = $region33
    $region32: #{tpu_custom_call.1} parent=1 // pred_region
      _
    $region33: #{tpu_custom_call.1} parent=1 // pred_fallthru
      _
    %114 = vsyncpa [#allocation5], 1
    %115 = vsyncpa [#allocation7], 1

</llo_original>
